<compile_context>
chip_gen: v7x
topology: tpu7x:2x2x1
jax: 0.10.0
libtpu: 0.0.40
codegen_flags: <defaults>
</compile_context>

<pallas_src>
import math

import jax
import jax.numpy as jnp
from jax import lax
from jax.experimental import pallas as pl
from jax.experimental.pallas import tpu as pltpu


def _emb_multilinear_kernel(ids_ref, emb_ref, pe_ref, wt_ref, b_ref,
                            o_ref, x_ref):
    # ids_ref: (ts, 1)  int32 VMEM — token ids for this tile (column vector)
    # emb_ref: (Vp, Hp) f32 VMEM   — embedding table * sqrt(H), resident
    # pe_ref : (ts, Hp) f32 VMEM   — sinusoidal PE slice, streamed per tile
    # wt_ref : (Hp, Hp) f32 VMEM   — W^T, resident
    # b_ref  : (1, Hp)  f32 VMEM   — bias, resident
    # o_ref  : (ts, Hp) output tile (batch dim squeezed)
    # x_ref  : (ts, Hp) f32 VMEM scratch — x = scaled emb + PE
    ts = x_ref.shape[0]
    vp = emb_ref.shape[0]

    # One-hot MXU gather: onehot[t, v] = (ids[t] == v); exact 0/1 coefficients,
    # so  onehot @ table  reproduces the gathered rows (OOB ids give zeros
    # instead of a silent OOB read).
    ids = ids_ref[...]                                      # (ts, 1) int32
    cols = lax.broadcasted_iota(jnp.int32, (ts, vp), 1)     # (ts, Vp)
    onehot = (ids == cols).astype(jnp.float32)

    # x = emb[ids] * sqrt(H) + pe   (sqrt(H) pre-folded into emb_ref)
    x_ref[...] = (
        jnp.dot(onehot, emb_ref[...], preferred_element_type=jnp.float32)
        + pe_ref[...]
    )

    # r = x @ W^T + b + 1 ;  z = x * r   (re-read x from VMEM: bounds vreg
    # pressure across the matmul instead of keeping ts*Hp f32 live in vregs)
    r = (jnp.dot(x_ref[...], wt_ref[...], preferred_element_type=jnp.float32)
         + b_ref[...]) + 1.0
    o_ref[...] = x_ref[...] * r
    # TODO(synk): training-mode nn.Dropout would need pltpu.prng_random_bits;
    # eval-mode (identity) dropout is what is reproduced here.
    # TODO(synk): for vocabularies too large to hold resident in VMEM (esp. v7x
    # 64 MiB/TC), keep the table in HBM (memory_space=pl.ANY) and gather rows
    # with a ring of overlapped pltpu.make_async_copy's instead of the one-hot
    # dot; also single-buffer the constant-index operands via
    # pipeline_mode=pl.Buffered(1) when VMEM-budget limited.


def sinusoidal_pe(seq_len, hidden_size):
    position = jnp.arange(seq_len, dtype=jnp.float32)[:, None]            # (S, 1)
    div_term = jnp.exp(
        jnp.arange(0, hidden_size, 2, dtype=jnp.float32)
        * (-math.log(10000.0) / hidden_size)
    )                                                                     # (H/2,)
    pe = jnp.zeros((seq_len, hidden_size), dtype=jnp.float32)
    pe = pe.at[:, 0::2].set(jnp.sin(position * div_term))
    pe = pe.at[:, 1::2].set(jnp.cos(position * div_term))
    return pe


def _vmem_limit_bytes():
    # Generation-aware VMEM budget: ~3/4 of physical, capped at 96 MiB
    # (v6e/v5e: ~96 MiB, v7x: ~48 MiB of its 64 MiB/TC).
    try:
        cap = int(pltpu.get_tpu_info().vmem_capacity_bytes)
    except Exception:
        cap = 64 * 1024 * 1024
    return int(min(cap * 3 // 4, 96 * 1024 * 1024))


def embedding_multilinear_sinusoidal(input_ids, emb_table, w, b, *, ts=256):
    """input_ids: [B, S] int; emb_table: [V, H]; w: [H, H]; b: [H] -> [B, S, H] f32."""
    B, S = input_ids.shape
    V, H = emb_table.shape
    scale = math.sqrt(float(H))

    # Lane-dense hidden/vocab dims (multiples of 128), 8-aligned sequence tile.
    Hp = ((H + 127) // 128) * 128
    Vp = ((V + 127) // 128) * 128
    ts = max(8, min(ts, ((S + 7) // 8) * 8))
    NS = pl.cdiv(S, ts)
    Sp = NS * ts

    # Padding (all padded rows / cols are sliced off after the kernel).
    ids_p = jnp.pad(input_ids.astype(jnp.int32), ((0, 0), (0, Sp - S)))[..., None]   # (B, Sp, 1)
    # Fold the sqrt(H) scale into the (already-copied-by-pad) embedding table.
    emb_p = jnp.pad(emb_table.astype(jnp.float32) * scale,
                    ((0, Vp - V), (0, Hp - H)))
    pe_p = jnp.pad(sinusoidal_pe(Sp, H), ((0, 0), (0, Hp - H)))
    wt_p = jnp.pad(jnp.transpose(w.astype(jnp.float32)),
                   ((0, Hp - H), (0, Hp - H)))
    b_p = jnp.pad(b.astype(jnp.float32).reshape(1, H), ((0, 0), (0, Hp - H)))

    out = pl.pallas_call(
        _emb_multilinear_kernel,
        out_shape=jax.ShapeDtypeStruct((B, Sp, Hp), jnp.float32),
        grid_spec=pltpu.PrefetchScalarGridSpec(
            num_scalar_prefetch=0,
            grid=(B, NS),
            in_specs=[
                pl.BlockSpec((None, ts, 1), lambda bi, ji: (bi, ji, 0)),   # ids per tile
                pl.BlockSpec((Vp, Hp), lambda bi, ji: (0, 0)),             # emb*sqrt(H) (resident)
                pl.BlockSpec((ts, Hp), lambda bi, ji: (ji, 0)),            # PE (streamed per tile)
                pl.BlockSpec((Hp, Hp), lambda bi, ji: (0, 0)),             # W^T (resident)
                pl.BlockSpec((1, Hp), lambda bi, ji: (0, 0)),              # bias (resident)
            ],
            out_specs=pl.BlockSpec((None, ts, Hp),
                                   lambda bi, ji: (bi, ji, 0)),
            scratch_shapes=[pltpu.VMEM((ts, Hp), jnp.float32)],
        ),
        compiler_params=pltpu.CompilerParams(
            dimension_semantics=("parallel", "parallel"),
            vmem_limit_bytes=_vmem_limit_bytes(),
        ),
    )(ids_p, emb_p, pe_p, wt_p, b_p)

    return out[:, :S, :H]


def reference(input_ids, emb_table, w, b):
    B, S = input_ids.shape
    H = emb_table.shape[1]
    token_emb = jnp.take(emb_table, input_ids, axis=0) * math.sqrt(float(H))
    pe = sinusoidal_pe(S, H)[None, :, :]
    x = token_emb + pe
    r = jnp.einsum("bsh,oh->bso", x, w) + b + 1.0
    return x * r


if __name__ == "__main__":
    B, S, H, V = 2, 8, 32, 64

    key = jax.random.PRNGKey(0)
    k_ids, k_emb, k_w, k_b = jax.random.split(key, 4)

    input_ids = jax.random.randint(k_ids, (B, S), 0, V, dtype=jnp.int32)
    # reset_parameters: N(0, 1/sqrt(H)) for embedding and linear weight.
    emb_table = jax.random.normal(k_emb, (V, H), jnp.float32) / math.sqrt(H)
    w = jax.random.normal(k_w, (H, H), jnp.float32) / math.sqrt(H)
    # nn.Linear default bias init: U(-1/sqrt(H), 1/sqrt(H)) (not reset).
    b = jax.random.uniform(k_b, (H,), jnp.float32,
                           minval=-1.0 / math.sqrt(H), maxval=1.0 / math.sqrt(H))

    out = embedding_multilinear_sinusoidal(input_ids, emb_table, w, b)
    out = jax.block_until_ready(out)

    ref = reference(input_ids, emb_table, w, b)
    assert out.shape == (B, S, H)
    assert jnp.allclose(out, ref, atol=1e-4, rtol=1e-4), "mismatch vs reference"

    print("KERNEL_OK")
</pallas_src>

<mosaic_0001>
module attributes {stable_mosaic.version = 11 : i64} {
  func.func @_emb_multilinear_kernel(%arg0: i32, %arg1: i32, %arg2: memref<1x8x1xi32, #tpu.memory_space<vmem>>, %arg3: memref<128x128xf32, #tpu.memory_space<vmem>>, %arg4: memref<8x128xf32, #tpu.memory_space<vmem>>, %arg5: memref<128x128xf32, #tpu.memory_space<vmem>>, %arg6: memref<1x128xf32, #tpu.memory_space<vmem>>, %arg7: memref<1x8x128xf32, #tpu.memory_space<vmem>>, %arg8: memref<8x128xf32, #tpu.memory_space<vmem>>) attributes {dimension_semantics = [#tpu.dimension_semantics<parallel>, #tpu.dimension_semantics<parallel>], iteration_bounds = array<i64: 2, 1>, scalar_prefetch = 0 : i64, scratch_operands = 1 : i64, tpu.core_type = #tpu.core_type<tc>, window_params = [{transform_indices = @transform_0, window_bounds = array<i64: 1, 8, 1>}, {pipeline_mode = #tpu.pipeline_mode<synchronous>, transform_indices = @transform_1, window_bounds = array<i64: 128, 128>}, {transform_indices = @transform_2, window_bounds = array<i64: 8, 128>}, {pipeline_mode = #tpu.pipeline_mode<synchronous>, transform_indices = @transform_3, window_bounds = array<i64: 128, 128>}, {pipeline_mode = #tpu.pipeline_mode<synchronous>, transform_indices = @transform_4, window_bounds = array<i64: 1, 128>}, {transform_indices = @transform_5, window_bounds = array<i64: 1, 8, 128>}]} {
    %c0 = arith.constant 0 : index
    %c0_0 = arith.constant 0 : index
    %c0_1 = arith.constant 0 : index
    %0 = vector.load %arg2[%c0, %c0_0, %c0_1] : memref<1x8x1xi32, #tpu.memory_space<vmem>>, vector<1x8x1xi32>
    %1 = vector.shape_cast %0 : vector<1x8x1xi32> to vector<8x1xi32>
    %2 = tpu.iota {dimensions = array<i32: 1>} : vector<8x128xi32>
    %3 = vector.broadcast %1 : vector<8x1xi32> to vector<8x128xi32>
    %4 = arith.cmpi eq, %3, %2 : vector<8x128xi32>
    %5 = arith.extui %4 : vector<8x128xi1> to vector<8x128xi32>
    %6 = arith.sitofp %5 : vector<8x128xi32> to vector<8x128xf32>
    %c0_2 = arith.constant 0 : index
    %c0_3 = arith.constant 0 : index
    %7 = vector.load %arg3[%c0_2, %c0_3] : memref<128x128xf32, #tpu.memory_space<vmem>>, vector<128x128xf32>
    %cst = arith.constant dense<0.000000e+00> : vector<8x128xf32>
    %8 = tpu.matmul %6, %7, %cst {dimension_numbers = #tpu.dot_dimension_numbers<[1], [0], [0], [1], [0, 0, 1, 1], [], []>} : vector<8x128xf32>, vector<128x128xf32>, vector<8x128xf32> -> vector<8x128xf32>
    %c0_4 = arith.constant 0 : index
    %c0_5 = arith.constant 0 : index
    %9 = vector.load %arg4[%c0_4, %c0_5] : memref<8x128xf32, #tpu.memory_space<vmem>>, vector<8x128xf32>
    %10 = arith.addf %8, %9 : vector<8x128xf32>
    %c0_6 = arith.constant 0 : index
    %c0_7 = arith.constant 0 : index
    %11 = vector.load %arg8[%c0_6, %c0_7] : memref<8x128xf32, #tpu.memory_space<vmem>>, vector<8x128xf32>
    tpu.vector_store %arg8[%c0_6, %c0_7], %10 {strides = array<i32>} : memref<8x128xf32, #tpu.memory_space<vmem>>, vector<8x128xf32>,
    %c0_8 = arith.constant 0 : index
    %c0_9 = arith.constant 0 : index
    %12 = vector.load %arg8[%c0_8, %c0_9] : memref<8x128xf32, #tpu.memory_space<vmem>>, vector<8x128xf32>
    %c0_10 = arith.constant 0 : index
    %c0_11 = arith.constant 0 : index
    %13 = vector.load %arg5[%c0_10, %c0_11] : memref<128x128xf32, #tpu.memory_space<vmem>>, vector<128x128xf32>
    %cst_12 = arith.constant dense<0.000000e+00> : vector<8x128xf32>
    %14 = tpu.matmul %12, %13, %cst_12 {dimension_numbers = #tpu.dot_dimension_numbers<[1], [0], [0], [1], [0, 0, 1, 1], [], []>} : vector<8x128xf32>, vector<128x128xf32>, vector<8x128xf32> -> vector<8x128xf32>
    %c0_13 = arith.constant 0 : index
    %c0_14 = arith.constant 0 : index
    %15 = vector.load %arg6[%c0_13, %c0_14] : memref<1x128xf32, #tpu.memory_space<vmem>>, vector<1x128xf32>
    %16 = vector.broadcast %15 : vector<1x128xf32> to vector<8x128xf32>
    %17 = arith.addf %14, %16 : vector<8x128xf32>
    %cst_15 = arith.constant 1.000000e+00 : f32
    %18 = vector.broadcast %cst_15 : f32 to vector<8x128xf32>
    %19 = arith.addf %17, %18 : vector<8x128xf32>
    %c0_16 = arith.constant 0 : index
    %c0_17 = arith.constant 0 : index
    %20 = vector.load %arg8[%c0_16, %c0_17] : memref<8x128xf32, #tpu.memory_space<vmem>>, vector<8x128xf32>
    %21 = arith.mulf %20, %19 : vector<8x128xf32>
    %c0_18 = arith.constant 0 : index
    %c0_19 = arith.constant 0 : index
    %c0_20 = arith.constant 0 : index
    %22 = vector.load %arg7[%c0_18, %c0_19, %c0_20] : memref<1x8x128xf32, #tpu.memory_space<vmem>>, vector<1x8x128xf32>
    %23 = vector.shape_cast %22 : vector<1x8x128xf32> to vector<8x128xf32>
    %24 = vector.shape_cast %21 : vector<8x128xf32> to vector<1x8x128xf32>
    tpu.vector_store %arg7[%c0_18, %c0_19, %c0_20], %24 {strides = array<i32>} : memref<1x8x128xf32, #tpu.memory_space<vmem>>, vector<1x8x128xf32>,
    return
  }
  func.func @transform_0(%arg0: i32, %arg1: i32) -> (i32, i32, i32) {
    %c0_i32 = arith.constant 0 : i32
    %c0_i32_0 = arith.constant 0 : i32
    return %arg0, %arg1, %c0_i32 : i32, i32, i32
  }
  func.func @transform_1(%arg0: i32, %arg1: i32) -> (i32, i32) {
    %c0_i32 = arith.constant 0 : i32
    %c0_i32_0 = arith.constant 0 : i32
    %c0_i32_1 = arith.constant 0 : i32
    return %c0_i32, %c0_i32_0 : i32, i32
  }
  func.func @transform_2(%arg0: i32, %arg1: i32) -> (i32, i32) {
    %c0_i32 = arith.constant 0 : i32
    %c0_i32_0 = arith.constant 0 : i32
    return %arg1, %c0_i32 : i32, i32
  }
  func.func @transform_3(%arg0: i32, %arg1: i32) -> (i32, i32) {
    %c0_i32 = arith.constant 0 : i32
    %c0_i32_0 = arith.constant 0 : i32
    %c0_i32_1 = arith.constant 0 : i32
    return %c0_i32, %c0_i32_0 : i32, i32
  }
  func.func @transform_4(%arg0: i32, %arg1: i32) -> (i32, i32) {
    %c0_i32 = arith.constant 0 : i32
    %c0_i32_0 = arith.constant 0 : i32
    %c0_i32_1 = arith.constant 0 : i32
    return %c0_i32, %c0_i32_0 : i32, i32
  }
  func.func @transform_5(%arg0: i32, %arg1: i32) -> (i32, i32, i32) {
    %c0_i32 = arith.constant 0 : i32
    %c0_i32_0 = arith.constant 0 : i32
    return %arg0, %arg1, %c0_i32 : i32, i32, i32
  }
}

</mosaic_0001>

<llo_original>
// kernel: tpu_custom_call.1
$region0: #{tpu_custom_call.1}
  #allocation0 [shape = 'u32[]', space=smem, size = 0x4, offset = 0x4, fixed_abs, tag = 'smem constant byte address 0x4 - core index']
  #allocation1 [shape = 'u32[144,128]{1,0:T(1,128)}', space=vmem, size = 0x12000, scoped, tag = 'internal scratch']
  #allocation2 [shape = 'f32[8,128]{1,0:T(8,128)}', space=vmem, size = 0x1000, scoped, tag = 'scratch operand']
  %s0 = inlined_call_operand.vmem [shape: s32[2,8,1], index: 0, kind: input, shape index: {}]
  %s1 = inlined_call_operand.hbm [shape: f32[128,128], index: 1, kind: input, shape index: {}]
  %s2 = inlined_call_operand.vmem [shape: f32[8,128], index: 2, kind: input, shape index: {}]
  %s3 = inlined_call_operand.hbm [shape: f32[128,128], index: 3, kind: input, shape index: {}]
  %s4 = inlined_call_operand.vmem [shape: f32[1,128], index: 4, kind: input, shape index: {}]
  %s5 = inlined_call_operand.hbm [shape: f32[2,8,128], index: 5, kind: output, shape index: {}]
  %s6 = sld [smem:[#allocation0]]
  $region61: #{tpu_custom_call.1} parent=0
    _
  %s8 = ssub.s32 1, %s6
  %s9 = scalar_select 0, %s8, %s6
  $region1: #{tpu_custom_call.1} parent=0
    #allocation3 [shape = 'u8[65536]{0}', space=vmem, size = 0x10000, scoped, tag = 'input window, operand 1, single buffered']
    #allocation4 [shape = 's32[2]{0}', space=sflag, size = 0x8, scoped, tag = 'scoped memory for tpu_custom_call.1']
    #allocation5 [shape = 's32[2]{0}', space=sflag, size = 0x8, scoped, tag = 'scoped memory for tpu_custom_call.1']
    #allocation6 [shape = 'u8[65536]{0}', space=vmem, size = 0x10000, scoped, tag = 'input window, operand 3, single buffered']
    #allocation7 [shape = 's32[1]{0}', space=sflag, size = 0x4, scoped, tag = 'scoped memory for tpu_custom_call.1']
    #allocation8 [shape = 'u8[8192]{0}', space=vmem, size = 0x2000, scoped, tag = 'output window, operand 0']
    %10 = vsyncpa [#allocation4], 0
    %11 = vsyncpa [#allocation7], 0
    %12 = vsyncpa [#allocation5], 0
    %s13 = scalar_lea.sflag [#allocation5], 1
    %14 = vsyncpa %s13, 0
    loop: start=0, step=1, limit=4
    $region2: #{tpu_custom_call.1} parent=1 // loop_pre_header
      _
    $region3: #{tpu_custom_call.1} parent=1 // loop_header
      %s16 = sphi 0, %s20
      %p17 = scmp.ge.s32.totalorder %s16, 4
      %s23 = sphi 0, %s35
      %s24 = sphi 0, %s31
      %s25 = sphi 0, %s23
      %s26 = sphi 0, %s24
      %s27 = sphi 0, %s25
      %s28 = sphi 0, %s26
      %s40 = sphi 0, %s42
      %s43 = sphi 0, %s40
      %s44 = sphi 0, %s43
      %s60 = sphi 0, %s44
      %s64 = sphi 0, %s64
      %s66 = sphi 0, %s64
      %s67 = sphi 0, %s66
      %s81 = sphi 0, %s67
      %s87 = sphi 0, %s89
      %s90 = sphi 0, %s87
      %s91 = sphi 0, %s90
      %s107 = sphi 0, %s91
      %s111 = sphi 0, %s111
      %s113 = sphi 0, %s111
      %s114 = sphi 0, %s113
      %s128 = sphi 0, %s114
      %s132 = sphi 0, %s132
      %s134 = sphi 0, %s132
      %s135 = sphi 0, %s134
      %s149 = sphi 0, %s135
      %s157 = sphi 0, %s159
      %s160 = sphi 0, %s157
      %s161 = sphi 0, %s160
      %s177 = sphi 0, %s161
    $region4: #{tpu_custom_call.1} parent=1 // loop_header_branch
      %19 = sbr.rel (%p17) target = $region8
    $region5: #{tpu_custom_call.1} parent=1 // loop_body
      %s21 = ssub.s32 %s16, 1
      %s22 = ssub.s32 %s16, 2
      %s29 = sadd.s32 1, %s24
      %p30 = scmp.ge.s32.totalorder %s29, 1
      %s31 = scalar_select %p30, 0, %s29
      %s32 = sadd.s32 1, %s23
      %s33 = scalar_select %p30, %s32, %s23
      %p34 = scmp.ge.s32.totalorder %s33, 2
      %s35 = scalar_select %p34, 0, %s33
      %s36 = ssub.s32 %s23, %s35
      %s37 = ssub.s32 %s24, %s31
      %s38 = sor.u32 %s36, %s37
      %p39 = scmp.eq.s32.totalorder %s38, 0
      %s41 = sadd.s32 %s40, 1
      %s42 = scalar_select %p39, %s40, %s41
      %p45 = pneg %p39
      %p46 = scmp.eq.s32.totalorder %s16, 1
      %p47 = por %p45, %p46
      %p48 = scmp.ne.s32.totalorder %s40, %s43
      %p49 = scmp.eq.s32.totalorder %s16, 0
      %p50 = por %p48, %p49
      %p51 = scmp.ne.s32.totalorder %s40, %s43
      %p52 = scmp.eq.s32.totalorder %s21, 1
      %p53 = por %p51, %p52
      %p54 = scmp.ne.s32.totalorder %s43, %s44
      %p55 = scmp.eq.s32.totalorder %s21, 0
      %p56 = por %p54, %p55
      %p57 = scmp.ne.s32.totalorder %s43, %s44
      %p58 = scmp.eq.s32.totalorder %s22, 1
      %p59 = por %p57, %p58
      %p61 = scmp.ne.s32.totalorder %s44, %s60
      %p62 = scmp.eq.s32.totalorder %s22, 0
      %p63 = por %p61, %p62
      %s65 = sadd.s32 %s64, 1
      %p68 = scmp.eq.s32.totalorder %s16, 1
      %p69 = scmp.ne.s32.totalorder %s64, %s66
      %p70 = scmp.eq.s32.totalorder %s16, 0
      %p71 = por %p69, %p70
      %p72 = scmp.ne.s32.totalorder %s64, %s66
      %p73 = scmp.eq.s32.totalorder %s21, 1
      %p74 = por %p72, %p73
      %p75 = scmp.ne.s32.totalorder %s66, %s67
      %p76 = scmp.eq.s32.totalorder %s21, 0
      %p77 = por %p75, %p76
      %p78 = scmp.ne.s32.totalorder %s66, %s67
      %p79 = scmp.eq.s32.totalorder %s22, 1
      %p80 = por %p78, %p79
      %p82 = scmp.ne.s32.totalorder %s67, %s81
      %p83 = scmp.eq.s32.totalorder %s22, 0
      %p84 = por %p82, %p83
      %s85 = ssub.s32 %s24, %s31
      %p86 = scmp.eq.s32.totalorder %s85, 0
      %s88 = sadd.s32 %s87, 1
      %s89 = scalar_select %p86, %s87, %s88
      %p92 = pneg %p86
      %p93 = scmp.eq.s32.totalorder %s16, 1
      %p94 = por %p92, %p93
      %p95 = scmp.ne.s32.totalorder %s87, %s90
      %p96 = scmp.eq.s32.totalorder %s16, 0
      %p97 = por %p95, %p96
      %p98 = scmp.ne.s32.totalorder %s87, %s90
      %p99 = scmp.eq.s32.totalorder %s21, 1
      %p100 = por %p98, %p99
      %p101 = scmp.ne.s32.totalorder %s90, %s91
      %p102 = scmp.eq.s32.totalorder %s21, 0
      %p103 = por %p101, %p102
      %p104 = scmp.ne.s32.totalorder %s90, %s91
      %p105 = scmp.eq.s32.totalorder %s22, 1
      %p106 = por %p104, %p105
      %p108 = scmp.ne.s32.totalorder %s91, %s107
      %p109 = scmp.eq.s32.totalorder %s22, 0
      %p110 = por %p108, %p109
      %s112 = sadd.s32 %s111, 1
      %p115 = scmp.eq.s32.totalorder %s16, 1
      %p116 = scmp.ne.s32.totalorder %s111, %s113
      %p117 = scmp.eq.s32.totalorder %s16, 0
      %p118 = por %p116, %p117
      %p119 = scmp.ne.s32.totalorder %s111, %s113
      %p120 = scmp.eq.s32.totalorder %s21, 1
      %p121 = por %p119, %p120
      %p122 = scmp.ne.s32.totalorder %s113, %s114
      %p123 = scmp.eq.s32.totalorder %s21, 0
      %p124 = por %p122, %p123
      %p125 = scmp.ne.s32.totalorder %s113, %s114
      %p126 = scmp.eq.s32.totalorder %s22, 1
      %p127 = por %p125, %p126
      %p129 = scmp.ne.s32.totalorder %s114, %s128
      %p130 = scmp.eq.s32.totalorder %s22, 0
      %p131 = por %p129, %p130
      %s133 = sadd.s32 %s132, 1
      %p136 = scmp.eq.s32.totalorder %s16, 1
      %p137 = scmp.ne.s32.totalorder %s132, %s134
      %p138 = scmp.eq.s32.totalorder %s16, 0
      %p139 = por %p137, %p138
      %p140 = scmp.ne.s32.totalorder %s132, %s134
      %p141 = scmp.eq.s32.totalorder %s21, 1
      %p142 = por %p140, %p141
      %p143 = scmp.ne.s32.totalorder %s134, %s135
      %p144 = scmp.eq.s32.totalorder %s21, 0
      %p145 = por %p143, %p144
      %p146 = scmp.ne.s32.totalorder %s134, %s135
      %p147 = scmp.eq.s32.totalorder %s22, 1
      %p148 = por %p146, %p147
      %p150 = scmp.ne.s32.totalorder %s135, %s149
      %p151 = scmp.eq.s32.totalorder %s22, 0
      %p152 = por %p150, %p151
      %s153 = ssub.s32 %s23, %s35
      %s154 = ssub.s32 %s24, %s31
      %s155 = sor.u32 %s153, %s154
      %p156 = scmp.eq.s32.totalorder %s155, 0
      %s158 = sadd.s32 %s157, 1
      %s159 = scalar_select %p156, %s157, %s158
      %p162 = pneg %p156
      %p163 = scmp.eq.s32.totalorder %s16, 1
      %p164 = por %p162, %p163
      %p165 = scmp.ne.s32.totalorder %s157, %s160
      %p166 = scmp.eq.s32.totalorder %s16, 0
      %p167 = por %p165, %p166
      %p168 = scmp.ne.s32.totalorder %s157, %s160
      %p169 = scmp.eq.s32.totalorder %s21, 1
      %p170 = por %p168, %p169
      %p171 = scmp.ne.s32.totalorder %s160, %s161
      %p172 = scmp.eq.s32.totalorder %s21, 0
      %p173 = por %p171, %p172
      %p174 = scmp.ne.s32.totalorder %s160, %s161
      %p175 = scmp.eq.s32.totalorder %s22, 1
      %p176 = por %p174, %p175
      %p178 = scmp.ne.s32.totalorder %s161, %s177
      %p179 = scmp.eq.s32.totalorder %s22, 0
      %p180 = por %p178, %p179
      %p181 = scmp.le.s32.totalorder 1, %s16
      %p182 = scmp.lt.s32.totalorder %s16, 3
      %p183 = pnand %p181, %p182
      %p184 = pneg %p183
      // Predicated region
      $region9: #{tpu_custom_call.1} parent=5 // pred_check
        _
      $region10: #{tpu_custom_call.1} parent=5 // pred_check_branch
        %186 = sbr.rel (%p183) target = $region12
      $region11: #{tpu_custom_call.1} parent=5 // pred_region
        %s187 = ssub.s32 %s16, 1
        // Predicated region
        $region13: #{tpu_custom_call.1} parent=11 // pred_check
          %p188 = pneg %p77
        $region14: #{tpu_custom_call.1} parent=11 // pred_check_branch
          %190 = sbr.rel (%p188) target = $region16
        $region15: #{tpu_custom_call.1} parent=11 // pred_region
          %s192 = ssub.s32 2048, 2048
          %193 = vsyncadd [#allocation4], %s192
          %s194 = sshll.u32 [#allocation3], 4
          %s195 = int_to_ptr.vmem [resolvable:$true] %s194
          %200 = dma.hbm_to_vmem [thread:$0]  %s1, 2048, %s195, [#allocation4], 128, 128, 8
        $region16: #{tpu_custom_call.1} parent=11 // pred_fallthru
          _
        // Predicated region
        $region17: #{tpu_custom_call.1} parent=11 // pred_check
          %p201 = pneg %p103
        $region18: #{tpu_custom_call.1} parent=11 // pred_check_branch
          %203 = sbr.rel (%p201) target = $region20
        $region19: #{tpu_custom_call.1} parent=11 // pred_region
          %p204 = scmp.lt.s32.totalorder %s26, 0
          %s205 = scalar_select %p204, %s26, 0
          %s206 = smul.addr %s205, 8
          %s207 = scalar_lea.vmem %s2, %s206
        $region20: #{tpu_custom_call.1} parent=11 // pred_fallthru
          _
        // Predicated region
        $region21: #{tpu_custom_call.1} parent=11 // pred_check
          %p208 = pneg %p124
        $region22: #{tpu_custom_call.1} parent=11 // pred_check_branch
          %210 = sbr.rel (%p208) target = $region24
        $region23: #{tpu_custom_call.1} parent=11 // pred_region
          %s212 = ssub.s32 2048, 2048
          %213 = vsyncadd [#allocation7], %s212
          %s214 = sshll.u32 [#allocation6], 4
          %s215 = int_to_ptr.vmem [resolvable:$true] %s214
          %220 = dma.hbm_to_vmem [thread:$0]  %s3, 2048, %s215, [#allocation7], 128, 128, 8
        $region24: #{tpu_custom_call.1} parent=11 // pred_fallthru
          _
        // Predicated region
        $region25: #{tpu_custom_call.1} parent=11 // pred_check
          %p221 = pneg %p145
        $region26: #{tpu_custom_call.1} parent=11 // pred_check_branch
          %223 = sbr.rel (%p221) target = $region28
        $region27: #{tpu_custom_call.1} parent=11 // pred_region
          _
        $region28: #{tpu_custom_call.1} parent=11 // pred_fallthru
          _
      $region12: #{tpu_custom_call.1} parent=5 // pred_fallthru
        _
      %p224 = scmp.lt.s32.totalorder %s16, 2
      // Predicated region
      $region29: #{tpu_custom_call.1} parent=5 // pred_check
        %p225 = pneg %p224
      $region30: #{tpu_custom_call.1} parent=5 // pred_check_branch
        %227 = sbr.rel (%p225) target = $region32
      $region31: #{tpu_custom_call.1} parent=5 // pred_region
        // Predicated region
        $region33: #{tpu_custom_call.1} parent=31 // pred_check
          %p228 = pneg %p50
        $region34: #{tpu_custom_call.1} parent=31 // pred_check_branch
          %230 = sbr.rel (%p228) target = $region36
        $region35: #{tpu_custom_call.1} parent=31 // pred_region
          %p231 = scmp.lt.s32.totalorder %s23, 1
          %s232 = scalar_select %p231, %s23, 1
          %p233 = scmp.lt.s32.totalorder %s24, 0
          %s234 = scalar_select %p233, %s24, 0
          %s235 = sadd.s32 %s234, %s232
          %s236 = smul.addr %s235, 8
          %s237 = scalar_lea.vmem %s0, %s236
        $region36: #{tpu_custom_call.1} parent=31 // pred_fallthru
          _
      $region32: #{tpu_custom_call.1} parent=5 // pred_fallthru
        _
      %p238 = scmp.le.s32.totalorder 1, %s16
      %p239 = scmp.lt.s32.totalorder %s16, 3
      %p240 = pnand %p238, %p239
      %p241 = pneg %p240
      // Predicated region
      $region37: #{tpu_custom_call.1} parent=5 // pred_check
        _
      $region38: #{tpu_custom_call.1} parent=5 // pred_check_branch
        %243 = sbr.rel (%p240) target = $region40
      $region39: #{tpu_custom_call.1} parent=5 // pred_region
        %s244 = ssub.s32 %s16, 1
        // Predicated region
        $region41: #{tpu_custom_call.1} parent=39 // pred_check
          %p245 = pneg %p77
        $region42: #{tpu_custom_call.1} parent=39 // pred_check_branch
          %247 = sbr.rel (%p245) target = $region44
        $region43: #{tpu_custom_call.1} parent=39 // pred_region
          %248 = dma.done [#allocation4], 2048
        $region44: #{tpu_custom_call.1} parent=39 // pred_fallthru
          _
        // Predicated region
        $region45: #{tpu_custom_call.1} parent=39 // pred_check
          %p249 = pneg %p124
        $region46: #{tpu_custom_call.1} parent=39 // pred_check_branch
          %251 = sbr.rel (%p249) target = $region48
        $region47: #{tpu_custom_call.1} parent=39 // pred_region
          %252 = dma.done [#allocation7], 2048
        $region48: #{tpu_custom_call.1} parent=39 // pred_fallthru
          _
        %p253 = scmp.lt.s32.totalorder %s25, 1
        %s254 = scalar_select %p253, %s25, 1
        %p255 = scmp.lt.s32.totalorder %s26, 0
        %s256 = scalar_select %p255, %s26, 0
        %s257 = sadd.s32 %s256, %s254
        %s258 = smul.addr %s257, 8
        %s259 = scalar_lea.vmem %s0, %s258
        %p260 = pneg %p56
        %p261 = pneg %p53
        %p262 = pneg %p77
        %p263 = pneg %p74
        %p264 = scmp.lt.s32.totalorder %s26, 0
        %s265 = scalar_select %p264, %s26, 0
        %s266 = smul.addr %s265, 8
        %s267 = scalar_lea.vmem %s2, %s266
        %p268 = pneg %p103
        %p269 = pneg %p100
        %p270 = pneg %p124
        %p271 = pneg %p121
        %p272 = pneg %p145
        %p273 = pneg %p142
        %p274 = pneg %p173
        %p275 = pneg %p170
        %s276 = sand.u32 %s160, 1
        %s277 = scalar_lea.sflag [#allocation5], %s276
        %s278 = sand.u32 %s160, 1
        %s279 = smul.addr %s278, 8
        %s280 = scalar_lea.vmem [#allocation8], %s279
        %p281 = scmp.lt.s32.totalorder %s25, 1
        %s282 = scalar_select %p281, %s25, 1
        %p283 = scmp.lt.s32.totalorder %s26, 0
        %s284 = scalar_select %p283, %s26, 0
        %s285 = sadd.s32 %s284, %s282
        %s286 = smul.addr %s285, 8
        %s287 = scalar_lea.vmem %s0, %s286
        %p288 = scmp.lt.s32.totalorder %s26, 0
        %s289 = scalar_select %p288, %s26, 0
        %s290 = smul.addr %s289, 8
        %s291 = scalar_lea.vmem %s2, %s290
        %v292 = vld [vmem:[%s287] sm:$0xff]
        %v293 = vlaneseq
        %v294 = vand.u32 %v293, 127
        %295 = vset.pattern.permute.xlu0 0
        %296 = vperm.xlu0 %295, %v292
        %v297 = vpop.permute.xlu0 %296
        %vm298 = vcmp.eq.s32.totalorder %v297, %v294
        %v299 = vsel %vm298, 1, 0
        %v300 = vcvt.s32.f32 %v299
        %v301 = vld [vmem:[#allocation3] sm:$0xff]
        %v302 = vld [vmem:[#allocation3 + $0x8] sm:$0xff]
        %v303 = vld [vmem:[#allocation3 + $0x10] sm:$0xff]
        %v304 = vld [vmem:[#allocation3 + $0x18] sm:$0xff]
        %v305 = vld [vmem:[#allocation3 + $0x20] sm:$0xff]
        %v306 = vld [vmem:[#allocation3 + $0x28] sm:$0xff]
        %v307 = vld [vmem:[#allocation3 + $0x30] sm:$0xff]
        %v308 = vld [vmem:[#allocation3 + $0x38] sm:$0xff]
        %v309 = vld [vmem:[#allocation3 + $0x40] sm:$0xff]
        %v310 = vld [vmem:[#allocation3 + $0x48] sm:$0xff]
        %v311 = vld [vmem:[#allocation3 + $0x50] sm:$0xff]
        %v312 = vld [vmem:[#allocation3 + $0x58] sm:$0xff]
        %v313 = vld [vmem:[#allocation3 + $0x60] sm:$0xff]
        %v314 = vld [vmem:[#allocation3 + $0x68] sm:$0xff]
        %v315 = vld [vmem:[#allocation3 + $0x70] sm:$0xff]
        %v316 = vld [vmem:[#allocation3 + $0x78] sm:$0xff]
        %v317 = vld [vmem:[%s291] sm:$0xff]
        %318 = vmatprep.subr.mxu0 0.0
        %319 = vmatpush1.msra.mxu0 %v301
        %320 = vmatprep.subr.mxu0 0.0
        %321 = vmatpush1.msra.mxu0 %v302
        %322 = vmatprep.subr.mxu0 0.0
        %323 = vmatpush1.msra.mxu0 %v303
        %324 = vmatprep.subr.mxu0 0.0
        %325 = vmatpush1.msra.mxu0 %v304
        %326 = vmatprep.subr.mxu0 0.0
        %327 = vmatpush1.msra.mxu0 %v305
        %328 = vmatprep.subr.mxu0 0.0
        %329 = vmatpush1.msra.mxu0 %v306
        %330 = vmatprep.subr.mxu0 0.0
        %331 = vmatpush1.msra.mxu0 %v307
        %332 = vmatprep.subr.mxu0 0.0
        %333 = vmatpush1.msra.mxu0 %v308
        %334 = vmatprep.subr.mxu0 0.0
        %335 = vmatpush1.msra.mxu0 %v309
        %336 = vmatprep.subr.mxu0 0.0
        %337 = vmatpush1.msra.mxu0 %v310
        %338 = vmatprep.subr.mxu0 0.0
        %339 = vmatpush1.msra.mxu0 %v311
        %340 = vmatprep.subr.mxu0 0.0
        %341 = vmatpush1.msra.mxu0 %v312
        %342 = vmatprep.subr.mxu0 0.0
        %343 = vmatpush1.msra.mxu0 %v313
        %344 = vmatprep.subr.mxu0 0.0
        %345 = vmatpush1.msra.mxu0 %v314
        %346 = vmatprep.subr.mxu0 0.0
        %347 = vmatpush1.msra.mxu0 %v315
        %348 = vmatprep.subr.mxu0 0.0
        %349 = vmatpush1.msra.mxu0 %v316
        %350 = vmatprep.subr.mxu0 0.0
        %351 = vmatpush1.msra.mxu0 0.0
        %352 = vmatprep.subr.mxu0 0.0
        %353 = vmatpush1.msra.mxu0 0.0
        %354 = vmatprep.subr.mxu0 0.0
        %355 = vmatpush1.msra.mxu0 0.0
        %356 = vmatprep.subr.mxu0 0.0
        %357 = vmatpush1.msra.mxu0 0.0
        %358 = vmatprep.subr.mxu0 0.0
        %359 = vmatpush1.msra.mxu0 0.0
        %360 = vmatprep.subr.mxu0 0.0
        %361 = vmatpush1.msra.mxu0 0.0
        %362 = vmatprep.subr.mxu0 0.0
        %363 = vmatpush1.msra.mxu0 0.0
        %364 = vmatprep.subr.mxu0 0.0
        %365 = vmatpush1.msra.mxu0 0.0
        %366 = vmatprep.subr.mxu0 0.0
        %367 = vmatpush1.msra.mxu0 0.0
        %368 = vmatprep.subr.mxu0 0.0
        %369 = vmatpush1.msra.mxu0 0.0
        %370 = vmatprep.subr.mxu0 0.0
        %371 = vmatpush1.msra.mxu0 0.0
        %372 = vmatprep.subr.mxu0 0.0
        %373 = vmatpush1.msra.mxu0 0.0
        %374 = vmatprep.subr.mxu0 0.0
        %375 = vmatpush1.msra.mxu0 0.0
        %376 = vmatprep.subr.mxu0 0.0
        %377 = vmatpush1.msra.mxu0 0.0
        %378 = vmatprep.subr.mxu0 0.0
        %379 = vmatpush1.msra.mxu0 0.0
        %380 = vmatprep.subr.mxu0 0.0
        %381 = vmatpush1.msra.mxu0 0.0
        %382 = vmatprep.mubr.f32.mxu0 0.0
        %383 = vmatmul.mubr.f32.gmra.mrb[0].mxu0 %v300
        %v384 = vpop.f32.mrb[0].mxu0
        %v385 = vadd.f32 %v317, %v384
        %v386 = vpop.f32.mrb[0].mxu0
        %387 = vdwg.mxu0
        %388 = vst [vmem:[#allocation2] sm:$0xff] %v385
        %v389 = vld [vmem:[#allocation2] sm:$0xff]
        %v390 = vld [vmem:[#allocation6] sm:$0xff]
        %v391 = vld [vmem:[#allocation6 + $0x8] sm:$0xff]
        %v392 = vld [vmem:[#allocation6 + $0x10] sm:$0xff]
        %v393 = vld [vmem:[#allocation6 + $0x18] sm:$0xff]
        %v394 = vld [vmem:[#allocation6 + $0x20] sm:$0xff]
        %v395 = vld [vmem:[#allocation6 + $0x28] sm:$0xff]
        %v396 = vld [vmem:[#allocation6 + $0x30] sm:$0xff]
        %v397 = vld [vmem:[#allocation6 + $0x38] sm:$0xff]
        %v398 = vld [vmem:[#allocation6 + $0x40] sm:$0xff]
        %v399 = vld [vmem:[#allocation6 + $0x48] sm:$0xff]
        %v400 = vld [vmem:[#allocation6 + $0x50] sm:$0xff]
        %v401 = vld [vmem:[#allocation6 + $0x58] sm:$0xff]
        %v402 = vld [vmem:[#allocation6 + $0x60] sm:$0xff]
        %v403 = vld [vmem:[#allocation6 + $0x68] sm:$0xff]
        %v404 = vld [vmem:[#allocation6 + $0x70] sm:$0xff]
        %v405 = vld [vmem:[#allocation6 + $0x78] sm:$0xff]
        %v406 = vld [vmem:[%s4] sm:$0x1]
        %v408 = vlaneseq
        %v409 = vshrl.u32 %v408, 7
        %v410 = vsub.s32 0, %v409
        %v411 = vrot.slane %v406, %v410
        %413 = vmatprep.subr.mxu0 0.0
        %414 = vmatpush1.msra.mxu0 %v390
        %415 = vmatprep.subr.mxu0 0.0
        %416 = vmatpush1.msra.mxu0 %v391
        %417 = vmatprep.subr.mxu0 0.0
        %418 = vmatpush1.msra.mxu0 %v392
        %419 = vmatprep.subr.mxu0 0.0
        %420 = vmatpush1.msra.mxu0 %v393
        %421 = vmatprep.subr.mxu0 0.0
        %422 = vmatpush1.msra.mxu0 %v394
        %423 = vmatprep.subr.mxu0 0.0
        %424 = vmatpush1.msra.mxu0 %v395
        %425 = vmatprep.subr.mxu0 0.0
        %426 = vmatpush1.msra.mxu0 %v396
        %427 = vmatprep.subr.mxu0 0.0
        %428 = vmatpush1.msra.mxu0 %v397
        %429 = vmatprep.subr.mxu0 0.0
        %430 = vmatpush1.msra.mxu0 %v398
        %431 = vmatprep.subr.mxu0 0.0
        %432 = vmatpush1.msra.mxu0 %v399
        %433 = vmatprep.subr.mxu0 0.0
        %434 = vmatpush1.msra.mxu0 %v400
        %435 = vmatprep.subr.mxu0 0.0
        %436 = vmatpush1.msra.mxu0 %v401
        %437 = vmatprep.subr.mxu0 0.0
        %438 = vmatpush1.msra.mxu0 %v402
        %439 = vmatprep.subr.mxu0 0.0
        %440 = vmatpush1.msra.mxu0 %v403
        %441 = vmatprep.subr.mxu0 0.0
        %442 = vmatpush1.msra.mxu0 %v404
        %443 = vmatprep.subr.mxu0 0.0
        %444 = vmatpush1.msra.mxu0 %v405
        %445 = vmatprep.subr.mxu0 0.0
        %446 = vmatpush1.msra.mxu0 0.0
        %447 = vmatprep.subr.mxu0 0.0
        %448 = vmatpush1.msra.mxu0 0.0
        %449 = vmatprep.subr.mxu0 0.0
        %450 = vmatpush1.msra.mxu0 0.0
        %451 = vmatprep.subr.mxu0 0.0
        %452 = vmatpush1.msra.mxu0 0.0
        %453 = vmatprep.subr.mxu0 0.0
        %454 = vmatpush1.msra.mxu0 0.0
        %455 = vmatprep.subr.mxu0 0.0
        %456 = vmatpush1.msra.mxu0 0.0
        %457 = vmatprep.subr.mxu0 0.0
        %458 = vmatpush1.msra.mxu0 0.0
        %459 = vmatprep.subr.mxu0 0.0
        %460 = vmatpush1.msra.mxu0 0.0
        %461 = vmatprep.subr.mxu0 0.0
        %462 = vmatpush1.msra.mxu0 0.0
        %463 = vmatprep.subr.mxu0 0.0
        %464 = vmatpush1.msra.mxu0 0.0
        %465 = vmatprep.subr.mxu0 0.0
        %466 = vmatpush1.msra.mxu0 0.0
        %467 = vmatprep.subr.mxu0 0.0
        %468 = vmatpush1.msra.mxu0 0.0
        %469 = vmatprep.subr.mxu0 0.0
        %470 = vmatpush1.msra.mxu0 0.0
        %471 = vmatprep.subr.mxu0 0.0
        %472 = vmatpush1.msra.mxu0 0.0
        %473 = vmatprep.subr.mxu0 0.0
        %474 = vmatpush1.msra.mxu0 0.0
        %475 = vmatprep.subr.mxu0 0.0
        %476 = vmatpush1.msra.mxu0 0.0
        %477 = vmatprep.mubr.f32.mxu0 0.0
        %478 = vmatmul.mubr.f32.gmra.mrb[0].mxu0 %v389
        %v479 = vpop.f32.mrb[0].mxu0
        %v480 = vadd.f32 %v411, %v479
        %v481 = vpop.f32.mrb[0].mxu0
        %482 = vdwg.mxu0
        %v483 = vadd.f32 %v480, 1.0
        %v484 = vmul.f32 %v389, %v483
        %485 = vst [vmem:[%s280] sm:$0xff] %v484
        %s486 = sand.u32 %s160, 1
        %s487 = scalar_lea.sflag [#allocation5], %s486
        %s488 = sand.u32 %s160, 1
        %s489 = smul.addr %s488, 8
        %s490 = scalar_lea.vmem [#allocation8], %s489
        // Predicated region
        $region49: #{tpu_custom_call.1} parent=39 // pred_check
          %p491 = pneg %p170
        $region50: #{tpu_custom_call.1} parent=39 // pred_check_branch
          %493 = sbr.rel (%p491) target = $region52
        $region51: #{tpu_custom_call.1} parent=39 // pred_region
          %s495 = ssub.s32 128, 128
          %496 = vsyncadd %s487, %s495
          %s497 = sadd.s32 %s26, %s25
          %s498 = smul.addr %s497, 128
          %s499 = scalar_lea.hbm %s5, %s498
          %s501 = sshll.u32 %s490, 4
          %s502 = int_to_ptr.vmem [resolvable:$true] %s501
          %504 = dma.vmem_to_hbm [thread:$0]  %s502, 128, %s499, %s487
        $region52: #{tpu_custom_call.1} parent=39 // pred_fallthru
          _
      $region40: #{tpu_custom_call.1} parent=5 // pred_fallthru
        _
      %p505 = scmp.le.s32.totalorder 2, %s16
      // Predicated region
      $region53: #{tpu_custom_call.1} parent=5 // pred_check
        %p506 = pneg %p505
      $region54: #{tpu_custom_call.1} parent=5 // pred_check_branch
        %508 = sbr.rel (%p506) target = $region56
      $region55: #{tpu_custom_call.1} parent=5 // pred_region
        %s509 = ssub.s32 %s16, 2
        // Predicated region
        $region57: #{tpu_custom_call.1} parent=55 // pred_check
          %p510 = pneg %p176
        $region58: #{tpu_custom_call.1} parent=55 // pred_check_branch
          %512 = sbr.rel (%p510) target = $region60
        $region59: #{tpu_custom_call.1} parent=55 // pred_region
          %s513 = sand.u32 %s161, 1
          %s514 = scalar_lea.sflag [#allocation5], %s513
          %s515 = sand.u32 %s161, 1
          %s516 = smul.addr %s515, 8
          %s517 = scalar_lea.vmem [#allocation8], %s516
          %518 = dma.done %s514, 128
        $region60: #{tpu_custom_call.1} parent=55 // pred_fallthru
          _
      $region56: #{tpu_custom_call.1} parent=5 // pred_fallthru
        _
    $region6: #{tpu_custom_call.1} parent=1 // loop_footer
      %s20 = sadd.s32 1, %s16
    $region7: #{tpu_custom_call.1} parent=1 // loop_footer_branch
      %15 = sbr.rel target = $region3
    $region8: #{tpu_custom_call.1} parent=1 // loop_exit
      _
    %519 = vsyncpa [#allocation4], 1
    %s520 = scalar_lea.sflag [#allocation4], 1
    %521 = vsyncpa %s520, 1
    %522 = vsyncpa [#allocation7], 1
    %523 = vsyncpa [#allocation5], 1
    %s524 = scalar_lea.sflag [#allocation5], 1
    %525 = vsyncpa %s524, 1

</llo_original>
